<compile_context>
chip_gen: v6e
topology: v6e:2x2x1
jax: 0.10.0
libtpu: 0.0.40
codegen_flags: <defaults>
</compile_context>

<pallas_src>
import jax
import jax.numpy as jnp
from jax.experimental import pallas as pl
from jax.experimental.pallas import tpu as pltpu

_LANE = 128
_SUBLANE = 8


def _round_up(x, m):
    return (x + m - 1) // m * m


# ---------------------------------------------------------------------------
# Pallas kernel: the whole VQA fusion head (masked pooling, pooler, fused image
# GAP + resnet.fc, elementwise fusion, linear1+ReLU, linear2) in one block.
# ---------------------------------------------------------------------------
def _vqa_head_kernel(emb_ref, mask_ref, img_ref,
                     wpool_ref, wfc_ref, w1_ref, w2_ref, bias_ref,
                     out_ref):
    # emb_ref  : (B, S, Dq)  f32   stand-in token embeddings
    # mask_ref : (B, S)      f32   attention mask
    # img_ref  : (B, C, HW)  f32   flattened NCHW image (GAP done here)
    # wpool_ref: (Dq, Dq)    bf16  stand-in BERT pooler dense
    # wfc_ref  : (C,  Di)    bf16  resnet.fc
    # w1_ref   : (Di, Dh)    bf16  linear1
    # w2_ref   : (Dh, Tp)    bf16  linear2 (output dim padded to 128-multiple)
    # bias_ref : (8,  Lmax)  f32   packed biases: rows = [pool, fc, l1, l2]
    # out_ref  : (B, Tp)     f32
    dq = wpool_ref.shape[1]
    di = wfc_ref.shape[1]
    dh = w1_ref.shape[1]
    tp = w2_ref.shape[1]

    # ---- text branch (stand-in for bert(idx, mask).pooler_output) ----------
    mask_f = mask_ref[...]                                    # (B, S) f32
    msum = jnp.sum(mask_f, axis=1, keepdims=True)             # (B, 1)
    # Masked token-sum as a batched matmul -> MXU (mask is a 1-row LHS).
    tok_sum = jnp.einsum(
        'bqs,bsd->bqd',
        mask_f.astype(jnp.bfloat16)[:, None, :],
        emb_ref[...].astype(jnp.bfloat16),
        preferred_element_type=jnp.float32)[:, 0, :]          # (B, Dq) f32
    inv_msum = pl.reciprocal(jnp.maximum(msum, 1.0), approx=True)   # EUP
    q_mean = tok_sum * inv_msum                               # (B, Dq)
    q_f = jnp.tanh(
        jnp.dot(q_mean.astype(jnp.bfloat16), wpool_ref[...],
                preferred_element_type=jnp.float32)
        + bias_ref[0:1, 0:dq])                                # (B, Dq)

    # ---- image branch: fused global-average-pool + resnet.fc ---------------
    i_feat = jnp.mean(img_ref[...], axis=-1)                  # (B, C)
    i_f = (jnp.dot(i_feat.astype(jnp.bfloat16), wfc_ref[...],
                   preferred_element_type=jnp.float32)
           + bias_ref[1:2, 0:di])                             # (B, Di)
    # i_drop / q_drop: Dropout(p=0.2) -> identity at inference.

    # ---- fusion + classifier head (exact module math, f32 elementwise) -----
    uni = i_f * q_f                                           # uni_f = i_f * q_f
    h = jnp.maximum(
        jnp.dot(uni.astype(jnp.bfloat16), w1_ref[...],
                preferred_element_type=jnp.float32)
        + bias_ref[2:3, 0:dh], 0.0)                           # q_relu(linear1(.))
    out = (jnp.dot(h.astype(jnp.bfloat16), w2_ref[...],
                   preferred_element_type=jnp.float32)
           + bias_ref[3:4, 0:tp])                             # linear2(.)
    out_ref[...] = out.astype(out_ref.dtype)


def _full_spec(shape):
    n = len(shape)
    return pl.BlockSpec(shape, lambda i, _n=n: (0,) * _n)


def vqa_head(emb, mask, img_flat, packed):
    """Single-block pallas_call: all operands VMEM-resident (fine at these
    sizes; see header comment for the realistic-scale v7x tiling plan)."""
    b_pad = emb.shape[0]
    t_pad = packed["w2"].shape[1]

    operands = (emb, mask, img_flat,
                packed["w_pool"], packed["w_fc"], packed["w1"], packed["w2"],
                packed["biases"])
    in_specs = [_full_spec(op.shape) for op in operands]
    out_spec = _full_spec((b_pad, t_pad))

    # Advisory cost hint so XLA schedules this custom call against neighbours
    # (the embedding gather / padding ops) instead of treating it as opaque.
    s, dq = emb.shape[1], emb.shape[2]
    c, hw = img_flat.shape[1], img_flat.shape[2]
    di, dh = packed["w1"].shape
    flops = (2 * b_pad * (s * dq + dq * dq + c * di + di * dh + dh * t_pad)
             + b_pad * c * hw)                 # matmuls + fused GAP reduction
    transcendentals = b_pad * (dq + 1)         # tanh + reciprocal
    bytes_accessed = (sum(int(op.size) * op.dtype.itemsize for op in operands)
                      + b_pad * t_pad * 4)

    return pl.pallas_call(
        _vqa_head_kernel,
        out_shape=jax.ShapeDtypeStruct((b_pad, t_pad), jnp.float32),
        grid=(1,),
        in_specs=in_specs,
        out_specs=out_spec,
        compiler_params=pltpu.CompilerParams(
            dimension_semantics=("arbitrary",)),
        cost_estimate=pl.CostEstimate(
            flops=flops,
            transcendentals=transcendentals,
            bytes_accessed=bytes_accessed),
    )(*operands)


# ---------------------------------------------------------------------------
# Deterministic parameter construction (shapes implied by __init__ / forward).
# ---------------------------------------------------------------------------
def make_params(key, vocab, dim_q, dim_i, img_feat_dim, dim_h, num_target):
    ks = jax.random.split(key, 8)
    scale = 0.05
    return {
        # stand-in token embedding table for the text backbone
        "emb_table": scale * jax.random.normal(ks[0], (vocab, dim_q), jnp.float32),
        # stand-in pooler (dense + tanh), mirroring BERT pooler shape (Dq, Dq)
        "w_pool": scale * jax.random.normal(ks[1], (dim_q, dim_q), jnp.float32),
        "b_pool": jnp.zeros((dim_q,), jnp.float32),
        # resnet.fc replacement: Linear(in_features -> dim_i)
        "w_fc": scale * jax.random.normal(ks[2], (img_feat_dim, dim_i), jnp.float32),
        "b_fc": scale * jax.random.normal(ks[3], (dim_i,), jnp.float32),
        # linear1: Linear(dim_i -> dim_h)
        "w1": scale * jax.random.normal(ks[4], (dim_i, dim_h), jnp.float32),
        "b1": scale * jax.random.normal(ks[5], (dim_h,), jnp.float32),
        # linear2: Linear(dim_h -> num_target)
        "w2": scale * jax.random.normal(ks[6], (dim_h, num_target), jnp.float32),
        "b2": scale * jax.random.normal(ks[7], (num_target,), jnp.float32),
    }


def pack_params(params, num_target):
    """One-time conversion to kernel-ready operands:
      * matmul weights cast to bf16 (native MXU path, f32 accumulation),
      * linear2 weight padded to a lane-dense (multiple-of-128) output width,
      * all biases packed into a single (8, Lmax) f32 array (fewer DMAs)."""
    dim_q = params["w_pool"].shape[1]
    dim_i = params["w_fc"].shape[1]
    dim_h = params["w1"].shape[1]
    t_pad = _round_up(num_target, _LANE)
    lmax = max(dim_q, dim_i, dim_h, t_pad)

    w2 = jnp.zeros((dim_h, t_pad), jnp.float32)
    w2 = w2.at[:, :num_target].set(params["w2"])

    biases = jnp.zeros((_SUBLANE, lmax), jnp.float32)
    biases = biases.at[0, :dim_q].set(params["b_pool"])
    biases = biases.at[1, :dim_i].set(params["b_fc"])
    biases = biases.at[2, :dim_h].set(params["b1"])
    biases = biases.at[3, :num_target].set(params["b2"])

    return {
        "emb_table": params["emb_table"],          # f32 (activation source)
        "w_pool": params["w_pool"].astype(jnp.bfloat16),
        "w_fc": params["w_fc"].astype(jnp.bfloat16),
        "w1": params["w1"].astype(jnp.bfloat16),
        "w2": w2.astype(jnp.bfloat16),
        "biases": biases,
    }


def vqa_forward(idx, mask, image, packed, num_target):
    # Glue: embedding lookup for the text stand-in (gather stays in plain JAX).
    b = idx.shape[0]
    b_pad = _round_up(b, _SUBLANE)

    emb = jnp.take(packed["emb_table"], idx, axis=0)              # (B, S, Dq)
    # Glue: only flatten NCHW -> (B, C, H*W); the GAP happens inside the kernel.
    img_flat = image.astype(jnp.float32).reshape(b, image.shape[1], -1)
    mask = mask.astype(jnp.float32)

    # Pad the batch (MXU M dim / sublane axis) to a multiple of 8.
    pad = b_pad - b
    if pad:
        emb = jnp.pad(emb, ((0, pad), (0, 0), (0, 0)))
        mask = jnp.pad(mask, ((0, pad), (0, 0)))
        img_flat = jnp.pad(img_flat, ((0, pad), (0, 0), (0, 0)))

    out = vqa_head(emb, mask, img_flat, packed)                   # (B_pad, T_pad)
    return out[:b, :num_target]


if __name__ == "__main__":
    # Small shapes consistent with the forward pass.
    B, S = 2, 8                 # batch, sequence length
    C, H, W = 4, 16, 16         # image NCHW
    VOCAB = 32
    DIM_Q = 32                  # stand-in pooler_output dim
    DIM_I = 32                  # dim_i (must equal DIM_Q for i_f * q_f)
    DIM_H = 64                  # dim_h
    NUM_TARGET = 16

    key = jax.random.PRNGKey(0)
    k_idx, k_img, k_par = jax.random.split(key, 3)

    idx = jax.random.randint(k_idx, (B, S), 0, VOCAB, dtype=jnp.int32)
    mask = jnp.concatenate(
        [jnp.ones((B, S - 2), jnp.float32), jnp.zeros((B, 2), jnp.float32)], axis=1)
    image = jax.random.normal(k_img, (B, C, H, W), jnp.float32)

    params = make_params(k_par, VOCAB, DIM_Q, DIM_I, C, DIM_H, NUM_TARGET)
    packed = pack_params(params, NUM_TARGET)

    out = vqa_forward(idx, mask, image, packed, NUM_TARGET)
    out = jax.block_until_ready(out)

    assert out.shape == (B, NUM_TARGET), out.shape
    assert jnp.all(jnp.isfinite(out))
    print("KERNEL_OK")
</pallas_src>

<mosaic_0001>
module attributes {stable_mosaic.version = 11 : i64} {
  func.func @_vqa_head_kernel(%arg0: i32, %arg1: memref<8x8x32xf32, #tpu.memory_space<vmem>>, %arg2: memref<8x8xf32, #tpu.memory_space<vmem>>, %arg3: memref<8x4x256xf32, #tpu.memory_space<vmem>>, %arg4: memref<32x32xbf16, #tpu.memory_space<vmem>>, %arg5: memref<4x32xbf16, #tpu.memory_space<vmem>>, %arg6: memref<32x64xbf16, #tpu.memory_space<vmem>>, %arg7: memref<64x128xbf16, #tpu.memory_space<vmem>>, %arg8: memref<8x128xf32, #tpu.memory_space<vmem>>, %arg9: memref<8x128xf32, #tpu.memory_space<vmem>>) attributes {dimension_semantics = [#tpu.dimension_semantics<arbitrary>], iteration_bounds = array<i64: 1>, scalar_prefetch = 0 : i64, scratch_operands = 0 : i64, tpu.core_type = #tpu.core_type<tc>, window_params = [{pipeline_mode = #tpu.pipeline_mode<synchronous>, transform_indices = @transform_0, window_bounds = array<i64: 8, 8, 32>}, {pipeline_mode = #tpu.pipeline_mode<synchronous>, transform_indices = @transform_1, window_bounds = array<i64: 8, 8>}, {pipeline_mode = #tpu.pipeline_mode<synchronous>, transform_indices = @transform_2, window_bounds = array<i64: 8, 4, 256>}, {pipeline_mode = #tpu.pipeline_mode<synchronous>, transform_indices = @transform_3, window_bounds = array<i64: 32, 32>}, {pipeline_mode = #tpu.pipeline_mode<synchronous>, transform_indices = @transform_4, window_bounds = array<i64: 4, 32>}, {pipeline_mode = #tpu.pipeline_mode<synchronous>, transform_indices = @transform_5, window_bounds = array<i64: 32, 64>}, {pipeline_mode = #tpu.pipeline_mode<synchronous>, transform_indices = @transform_6, window_bounds = array<i64: 64, 128>}, {pipeline_mode = #tpu.pipeline_mode<synchronous>, transform_indices = @transform_7, window_bounds = array<i64: 8, 128>}, {pipeline_mode = #tpu.pipeline_mode<synchronous>, transform_indices = @transform_8, window_bounds = array<i64: 8, 128>}]} {
    %c0 = arith.constant 0 : index
    %c0_0 = arith.constant 0 : index
    %0 = vector.load %arg2[%c0, %c0_0] : memref<8x8xf32, #tpu.memory_space<vmem>>, vector<8x8xf32>
    %cst = arith.constant dense<0.000000e+00> : vector<8xf32>
    %1 = vector.multi_reduction <add>, %0, %cst [1] : vector<8x8xf32> to vector<8xf32>
    %2 = vector.shape_cast %1 : vector<8xf32> to vector<8x1xf32>
    %3 = arith.truncf %0 : vector<8x8xf32> to vector<8x8xbf16>
    %4 = vector.shape_cast %3 : vector<8x8xbf16> to vector<8x1x8xbf16>
    %c0_1 = arith.constant 0 : index
    %c0_2 = arith.constant 0 : index
    %c0_3 = arith.constant 0 : index
    %5 = vector.load %arg1[%c0_1, %c0_2, %c0_3] : memref<8x8x32xf32, #tpu.memory_space<vmem>>, vector<8x8x32xf32>
    %6 = arith.truncf %5 : vector<8x8x32xf32> to vector<8x8x32xbf16>
    "tpu.trace_start"() <{level = 10 : i32, message = "bqs,bsd->bqd"}> : () -> ()
    %cst_4 = arith.constant dense<0.000000e+00> : vector<8x1x32xf32>
    %7 = tpu.matmul %4, %6, %cst_4 {dimension_numbers = #tpu.dot_dimension_numbers<[2], [1], [1], [2], [0, 0, 0, 1, 1, 2], [0], [0]>} : vector<8x1x8xbf16>, vector<8x8x32xbf16>, vector<8x1x32xf32> -> vector<8x1x32xf32>
    "tpu.trace_stop"() : () -> ()
    %8 = vector.shape_cast %7 : vector<8x1x32xf32> to vector<8x32xf32>
    %cst_5 = arith.constant 1.000000e+00 : f32
    %9 = vector.broadcast %cst_5 : f32 to vector<8x1xf32>
    %10 = arith.maximumf %2, %9 : vector<8x1xf32>
    %11 = tpu.reciprocal %10 {approx = true} : vector<8x1xf32> -> vector<8x1xf32>
    %12 = vector.broadcast %11 : vector<8x1xf32> to vector<8x32xf32>
    %13 = arith.mulf %8, %12 : vector<8x32xf32>
    %14 = arith.truncf %13 : vector<8x32xf32> to vector<8x32xbf16>
    %c0_6 = arith.constant 0 : index
    %c0_7 = arith.constant 0 : index
    %15 = vector.load %arg4[%c0_6, %c0_7] : memref<32x32xbf16, #tpu.memory_space<vmem>>, vector<32x32xbf16>
    %cst_8 = arith.constant dense<0.000000e+00> : vector<8x32xf32>
    %16 = tpu.matmul %14, %15, %cst_8 {dimension_numbers = #tpu.dot_dimension_numbers<[1], [0], [0], [1], [0, 0, 1, 1], [], []>} : vector<8x32xbf16>, vector<32x32xbf16>, vector<8x32xf32> -> vector<8x32xf32>
    %c0_9 = arith.constant 0 : index
    %c0_10 = arith.constant 0 : index
    %17 = vector.load %arg8[%c0_9, %c0_10] : memref<8x128xf32, #tpu.memory_space<vmem>>, vector<1x32xf32>
    %18 = vector.broadcast %17 : vector<1x32xf32> to vector<8x32xf32>
    %19 = arith.addf %16, %18 : vector<8x32xf32>
    %20 = math.tanh %19 : vector<8x32xf32>
    %c0_11 = arith.constant 0 : index
    %c0_12 = arith.constant 0 : index
    %c0_13 = arith.constant 0 : index
    %21 = vector.load %arg3[%c0_11, %c0_12, %c0_13] : memref<8x4x256xf32, #tpu.memory_space<vmem>>, vector<8x4x256xf32>
    %cst_14 = arith.constant dense<0.000000e+00> : vector<8x4xf32>
    %22 = vector.multi_reduction <add>, %21, %cst_14 [2] : vector<8x4x256xf32> to vector<8x4xf32>
    %cst_15 = arith.constant 2.560000e+02 : f32
    %23 = vector.broadcast %cst_15 : f32 to vector<8x4xf32>
    %24 = arith.divf %22, %23 : vector<8x4xf32>
    %25 = arith.truncf %24 : vector<8x4xf32> to vector<8x4xbf16>
    %c0_16 = arith.constant 0 : index
    %c0_17 = arith.constant 0 : index
    %26 = vector.load %arg5[%c0_16, %c0_17] : memref<4x32xbf16, #tpu.memory_space<vmem>>, vector<4x32xbf16>
    %cst_18 = arith.constant dense<0.000000e+00> : vector<8x32xf32>
    %27 = tpu.matmul %25, %26, %cst_18 {dimension_numbers = #tpu.dot_dimension_numbers<[1], [0], [0], [1], [0, 0, 1, 1], [], []>} : vector<8x4xbf16>, vector<4x32xbf16>, vector<8x32xf32> -> vector<8x32xf32>
    %c1 = arith.constant 1 : index
    %c0_19 = arith.constant 0 : index
    %28 = vector.load %arg8[%c1, %c0_19] : memref<8x128xf32, #tpu.memory_space<vmem>>, vector<1x32xf32>
    %29 = vector.broadcast %28 : vector<1x32xf32> to vector<8x32xf32>
    %30 = arith.addf %27, %29 : vector<8x32xf32>
    %31 = arith.mulf %30, %20 : vector<8x32xf32>
    %32 = arith.truncf %31 : vector<8x32xf32> to vector<8x32xbf16>
    %c0_20 = arith.constant 0 : index
    %c0_21 = arith.constant 0 : index
    %33 = vector.load %arg6[%c0_20, %c0_21] : memref<32x64xbf16, #tpu.memory_space<vmem>>, vector<32x64xbf16>
    %cst_22 = arith.constant dense<0.000000e+00> : vector<8x64xf32>
    %34 = tpu.matmul %32, %33, %cst_22 {dimension_numbers = #tpu.dot_dimension_numbers<[1], [0], [0], [1], [0, 0, 1, 1], [], []>} : vector<8x32xbf16>, vector<32x64xbf16>, vector<8x64xf32> -> vector<8x64xf32>
    %c2 = arith.constant 2 : index
    %c0_23 = arith.constant 0 : index
    %35 = vector.load %arg8[%c2, %c0_23] : memref<8x128xf32, #tpu.memory_space<vmem>>, vector<1x64xf32>
    %36 = vector.broadcast %35 : vector<1x64xf32> to vector<8x64xf32>
    %37 = arith.addf %34, %36 : vector<8x64xf32>
    %cst_24 = arith.constant 0.000000e+00 : f32
    %38 = vector.broadcast %cst_24 : f32 to vector<8x64xf32>
    %39 = arith.maximumf %37, %38 : vector<8x64xf32>
    %40 = arith.truncf %39 : vector<8x64xf32> to vector<8x64xbf16>
    %c0_25 = arith.constant 0 : index
    %c0_26 = arith.constant 0 : index
    %41 = vector.load %arg7[%c0_25, %c0_26] : memref<64x128xbf16, #tpu.memory_space<vmem>>, vector<64x128xbf16>
    %cst_27 = arith.constant dense<0.000000e+00> : vector<8x128xf32>
    %42 = tpu.matmul %40, %41, %cst_27 {dimension_numbers = #tpu.dot_dimension_numbers<[1], [0], [0], [1], [0, 0, 1, 1], [], []>} : vector<8x64xbf16>, vector<64x128xbf16>, vector<8x128xf32> -> vector<8x128xf32>
    %c3 = arith.constant 3 : index
    %c0_28 = arith.constant 0 : index
    %43 = vector.load %arg8[%c3, %c0_28] : memref<8x128xf32, #tpu.memory_space<vmem>>, vector<1x128xf32>
    %44 = vector.broadcast %43 : vector<1x128xf32> to vector<8x128xf32>
    %45 = arith.addf %42, %44 : vector<8x128xf32>
    %c0_29 = arith.constant 0 : index
    %c0_30 = arith.constant 0 : index
    %46 = vector.load %arg9[%c0_29, %c0_30] : memref<8x128xf32, #tpu.memory_space<vmem>>, vector<8x128xf32>
    tpu.vector_store %arg9[%c0_29, %c0_30], %45 {strides = array<i32>} : memref<8x128xf32, #tpu.memory_space<vmem>>, vector<8x128xf32>,
    return
  }
  func.func @transform_0(%arg0: i32) -> (i32, i32, i32) {
    %c0_i32 = arith.constant 0 : i32
    %c0_i32_0 = arith.constant 0 : i32
    %c0_i32_1 = arith.constant 0 : i32
    %c0_i32_2 = arith.constant 0 : i32
    return %c0_i32, %c0_i32_0, %c0_i32_1 : i32, i32, i32
  }
  func.func @transform_1(%arg0: i32) -> (i32, i32) {
    %c0_i32 = arith.constant 0 : i32
    %c0_i32_0 = arith.constant 0 : i32
    %c0_i32_1 = arith.constant 0 : i32
    return %c0_i32, %c0_i32_0 : i32, i32
  }
  func.func @transform_2(%arg0: i32) -> (i32, i32, i32) {
    %c0_i32 = arith.constant 0 : i32
    %c0_i32_0 = arith.constant 0 : i32
    %c0_i32_1 = arith.constant 0 : i32
    %c0_i32_2 = arith.constant 0 : i32
    return %c0_i32, %c0_i32_0, %c0_i32_1 : i32, i32, i32
  }
  func.func @transform_3(%arg0: i32) -> (i32, i32) {
    %c0_i32 = arith.constant 0 : i32
    %c0_i32_0 = arith.constant 0 : i32
    %c0_i32_1 = arith.constant 0 : i32
    return %c0_i32, %c0_i32_0 : i32, i32
  }
  func.func @transform_4(%arg0: i32) -> (i32, i32) {
    %c0_i32 = arith.constant 0 : i32
    %c0_i32_0 = arith.constant 0 : i32
    %c0_i32_1 = arith.constant 0 : i32
    return %c0_i32, %c0_i32_0 : i32, i32
  }
  func.func @transform_5(%arg0: i32) -> (i32, i32) {
    %c0_i32 = arith.constant 0 : i32
    %c0_i32_0 = arith.constant 0 : i32
    %c0_i32_1 = arith.constant 0 : i32
    return %c0_i32, %c0_i32_0 : i32, i32
  }
  func.func @transform_6(%arg0: i32) -> (i32, i32) {
    %c0_i32 = arith.constant 0 : i32
    %c0_i32_0 = arith.constant 0 : i32
    %c0_i32_1 = arith.constant 0 : i32
    return %c0_i32, %c0_i32_0 : i32, i32
  }
  func.func @transform_7(%arg0: i32) -> (i32, i32) {
    %c0_i32 = arith.constant 0 : i32
    %c0_i32_0 = arith.constant 0 : i32
    %c0_i32_1 = arith.constant 0 : i32
    return %c0_i32, %c0_i32_0 : i32, i32
  }
  func.func @transform_8(%arg0: i32) -> (i32, i32) {
    %c0_i32 = arith.constant 0 : i32
    %c0_i32_0 = arith.constant 0 : i32
    %c0_i32_1 = arith.constant 0 : i32
    return %c0_i32, %c0_i32_0 : i32, i32
  }
}

</mosaic_0001>

<llo_original>
// kernel: tpu_custom_call.1
$region0: #{tpu_custom_call.1}
  #allocation0 [shape = 'u32[]', space=smem, size = 0x4, offset = 0x4, fixed_abs, tag = 'smem constant byte address 0x4 - core index']
  #allocation1 [shape = 'u32[144,128]{1,0:T(1,128)}', space=vmem, size = 0x12000, scoped, tag = 'internal scratch']
  %s0 = inlined_call_operand.hbm [shape: f32[8,8,32], index: 0, kind: input, shape index: {}]
  %s1 = inlined_call_operand.hbm [shape: f32[8,8], index: 1, kind: input, shape index: {}]
  %s2 = inlined_call_operand.hbm [shape: f32[8,4,256], index: 2, kind: input, shape index: {}]
  %s3 = inlined_call_operand.hbm [shape: bf16[32,32], index: 3, kind: input, shape index: {}]
  %s4 = inlined_call_operand.vmem [shape: bf16[4,32], index: 4, kind: input, shape index: {}]
  %s5 = inlined_call_operand.hbm [shape: bf16[32,64], index: 5, kind: input, shape index: {}]
  %s6 = inlined_call_operand.hbm [shape: bf16[64,128], index: 6, kind: input, shape index: {}]
  %s7 = inlined_call_operand.vmem [shape: f32[8,128], index: 7, kind: input, shape index: {}]
  %s8 = inlined_call_operand.hbm [shape: f32[8,128], index: 8, kind: output, shape index: {}]
  %s9 = sld [smem:[#allocation0]]
  $region66: #{tpu_custom_call.1} parent=0
    _
  %s11 = ssub.s32 1, %s9
  %s12 = scalar_select 0, %s11, %s9
  $region1: #{tpu_custom_call.1} parent=0
    #allocation2 [shape = 'u8[32768]{0}', space=vmem, size = 0x8000, scoped, tag = 'input window, operand 0, single buffered']
    #allocation3 [shape = 's32[1]{0}', space=sflag, size = 0x4, scoped, tag = 'scoped memory for tpu_custom_call.1']
    #allocation4 [shape = 's32[1]{0}', space=sflag, size = 0x4, scoped, tag = 'scoped memory for tpu_custom_call.1']
    #allocation5 [shape = 'u8[4096]{0}', space=vmem, size = 0x1000, scoped, tag = 'input window, operand 1, single buffered']
    #allocation6 [shape = 's32[1]{0}', space=sflag, size = 0x4, scoped, tag = 'scoped memory for tpu_custom_call.1']
    #allocation7 [shape = 'u8[32768]{0}', space=vmem, size = 0x8000, scoped, tag = 'input window, operand 2, single buffered']
    #allocation8 [shape = 'u8[8192]{0}', space=vmem, size = 0x2000, scoped, tag = 'input window, operand 3, single buffered']
    #allocation9 [shape = 's32[1]{0}', space=sflag, size = 0x4, scoped, tag = 'scoped memory for tpu_custom_call.1']
    #allocation10 [shape = 'u8[8192]{0}', space=vmem, size = 0x2000, scoped, tag = 'input window, operand 5, single buffered']
    #allocation11 [shape = 'u8[16384]{0}', space=vmem, size = 0x4000, scoped, tag = 'input window, operand 6, single buffered']
    #allocation12 [shape = 's32[1]{0}', space=sflag, size = 0x4, scoped, tag = 'scoped memory for tpu_custom_call.1']
    #allocation13 [shape = 'u8[4096]{0}', space=vmem, size = 0x1000, scoped, tag = 'output window, operand 0, single buffered']
    %13 = vsyncpa [#allocation3], 0
    %14 = vsyncpa [#allocation6], 0
    %15 = vsyncpa [#allocation9], 0
    %16 = vsyncpa [#allocation12], 0
    %17 = vsyncpa [#allocation4], 0
    // Predicated region
    $region2: #{tpu_custom_call.1} parent=1 // pred_check
      _
    $region3: #{tpu_custom_call.1} parent=1 // pred_check_branch
      %19 = sbr.rel (0) target = $region5
    $region4: #{tpu_custom_call.1} parent=1 // pred_region
      %s21 = ssub.s32 1024, 1024
      %22 = vsyncadd [#allocation3], %s21
      %s23 = sshll.u32 [#allocation2], 4
      %s24 = int_to_ptr.vmem [resolvable:$true] %s23
      %29 = dma.hbm_to_vmem [thread:$0]  %s0, 1024, %s24, [#allocation3], 128, 128, 8
    $region5: #{tpu_custom_call.1} parent=1 // pred_fallthru
      _
    // Predicated region
    $region6: #{tpu_custom_call.1} parent=1 // pred_check
      _
    $region7: #{tpu_custom_call.1} parent=1 // pred_check_branch
      %31 = sbr.rel (0) target = $region9
    $region8: #{tpu_custom_call.1} parent=1 // pred_region
      %s33 = ssub.s32 128, 128
      %34 = vsyncadd [#allocation6], %s33
      %s36 = sshll.u32 [#allocation5], 4
      %s37 = int_to_ptr.vmem [resolvable:$true] %s36
      %39 = dma.hbm_to_vmem [thread:$0]  %s1, 128, %s37, [#allocation6]
    $region9: #{tpu_custom_call.1} parent=1 // pred_fallthru
      _
    // Predicated region
    $region10: #{tpu_custom_call.1} parent=1 // pred_check
      _
    $region11: #{tpu_custom_call.1} parent=1 // pred_check_branch
      %41 = sbr.rel (0) target = $region13
    $region12: #{tpu_custom_call.1} parent=1 // pred_region
      %s43 = ssub.s32 1024, 1024
      %44 = vsyncadd [#allocation6], %s43
      %s45 = sshll.u32 [#allocation7], 4
      %s46 = int_to_ptr.vmem [resolvable:$true] %s45
      %51 = dma.hbm_to_vmem [thread:$0]  %s2, 1024, %s46, [#allocation6], 128, 128, 8
    $region13: #{tpu_custom_call.1} parent=1 // pred_fallthru
      _
    // Predicated region
    $region14: #{tpu_custom_call.1} parent=1 // pred_check
      _
    $region15: #{tpu_custom_call.1} parent=1 // pred_check_branch
      %53 = sbr.rel (0) target = $region17
    $region16: #{tpu_custom_call.1} parent=1 // pred_region
      %s55 = ssub.s32 256, 256
      %56 = vsyncadd [#allocation9], %s55
      %s57 = sshll.u32 [#allocation8], 4
      %s58 = int_to_ptr.vmem [resolvable:$true] %s57
      %63 = dma.hbm_to_vmem [thread:$0]  %s3, 256, %s58, [#allocation9], 64, 64, 4
    $region17: #{tpu_custom_call.1} parent=1 // pred_fallthru
      _
    // Predicated region
    $region18: #{tpu_custom_call.1} parent=1 // pred_check
      _
    $region19: #{tpu_custom_call.1} parent=1 // pred_check_branch
      %65 = sbr.rel (0) target = $region21
    $region20: #{tpu_custom_call.1} parent=1 // pred_region
      _
    $region21: #{tpu_custom_call.1} parent=1 // pred_fallthru
      _
    // Predicated region
    $region22: #{tpu_custom_call.1} parent=1 // pred_check
      _
    $region23: #{tpu_custom_call.1} parent=1 // pred_check_branch
      %67 = sbr.rel (0) target = $region25
    $region24: #{tpu_custom_call.1} parent=1 // pred_region
      %s69 = ssub.s32 256, 256
      %70 = vsyncadd [#allocation9], %s69
      %s71 = sshll.u32 [#allocation10], 4
      %s72 = int_to_ptr.vmem [resolvable:$true] %s71
      %77 = dma.hbm_to_vmem [thread:$0]  %s5, 256, %s72, [#allocation9], 64, 64, 4
    $region25: #{tpu_custom_call.1} parent=1 // pred_fallthru
      _
    // Predicated region
    $region26: #{tpu_custom_call.1} parent=1 // pred_check
      _
    $region27: #{tpu_custom_call.1} parent=1 // pred_check_branch
      %79 = sbr.rel (0) target = $region29
    $region28: #{tpu_custom_call.1} parent=1 // pred_region
      %s81 = ssub.s32 512, 512
      %82 = vsyncadd [#allocation12], %s81
      %s83 = sshll.u32 [#allocation11], 4
      %s84 = int_to_ptr.vmem [resolvable:$true] %s83
      %89 = dma.hbm_to_vmem [thread:$0]  %s6, 512, %s84, [#allocation12], 64, 64, 4
    $region29: #{tpu_custom_call.1} parent=1 // pred_fallthru
      _
    // Predicated region
    $region30: #{tpu_custom_call.1} parent=1 // pred_check
      _
    $region31: #{tpu_custom_call.1} parent=1 // pred_check_branch
      %91 = sbr.rel (0) target = $region33
    $region32: #{tpu_custom_call.1} parent=1 // pred_region
      _
    $region33: #{tpu_custom_call.1} parent=1 // pred_fallthru
      _
    // Predicated region
    $region34: #{tpu_custom_call.1} parent=1 // pred_check
      _
    $region35: #{tpu_custom_call.1} parent=1 // pred_check_branch
      %93 = sbr.rel (0) target = $region37
    $region36: #{tpu_custom_call.1} parent=1 // pred_region
      %94 = dma.done [#allocation3], 1024
    $region37: #{tpu_custom_call.1} parent=1 // pred_fallthru
      _
    // Predicated region
    $region38: #{tpu_custom_call.1} parent=1 // pred_check
      _
    $region39: #{tpu_custom_call.1} parent=1 // pred_check_branch
      %96 = sbr.rel (0) target = $region41
    $region40: #{tpu_custom_call.1} parent=1 // pred_region
      %97 = dma.done [#allocation6], 128
    $region41: #{tpu_custom_call.1} parent=1 // pred_fallthru
      _
    // Predicated region
    $region42: #{tpu_custom_call.1} parent=1 // pred_check
      _
    $region43: #{tpu_custom_call.1} parent=1 // pred_check_branch
      %99 = sbr.rel (0) target = $region45
    $region44: #{tpu_custom_call.1} parent=1 // pred_region
      %100 = dma.done [#allocation6], 1024
    $region45: #{tpu_custom_call.1} parent=1 // pred_fallthru
      _
    // Predicated region
    $region46: #{tpu_custom_call.1} parent=1 // pred_check
      _
    $region47: #{tpu_custom_call.1} parent=1 // pred_check_branch
      %102 = sbr.rel (0) target = $region49
    $region48: #{tpu_custom_call.1} parent=1 // pred_region
      %103 = dma.done [#allocation9], 256
    $region49: #{tpu_custom_call.1} parent=1 // pred_fallthru
      _
    // Predicated region
    $region50: #{tpu_custom_call.1} parent=1 // pred_check
      _
    $region51: #{tpu_custom_call.1} parent=1 // pred_check_branch
      %105 = sbr.rel (0) target = $region53
    $region52: #{tpu_custom_call.1} parent=1 // pred_region
      %106 = dma.done [#allocation9], 256
    $region53: #{tpu_custom_call.1} parent=1 // pred_fallthru
      _
    // Predicated region
    $region54: #{tpu_custom_call.1} parent=1 // pred_check
      _
    $region55: #{tpu_custom_call.1} parent=1 // pred_check_branch
      %108 = sbr.rel (0) target = $region57
    $region56: #{tpu_custom_call.1} parent=1 // pred_region
      %109 = dma.done [#allocation12], 512
    $region57: #{tpu_custom_call.1} parent=1 // pred_fallthru
      _
    %v111 = vld [vmem:[#allocation5] sm:$0xff]
    %vm112 = vcmask 64512
    %v113 = vsel %vm112, %v111, 0.0
    %114 = vadd.xlane.f32.xlu0 %v113
    %v115 = vpop.xlane.xlu0 %114
    %v116 = vpack.c.bf16 %v111, %v111
    %v119 = vunpack.c.l.s4 1966171168
    %v120 = vunpack.c.0.s8 %v119
    %v121 = vlaneseq
    %v122 = vshrl.u32 %v121, 7
    %v123 = vsub.s32 %v120, %v122
    %v124 = vrot.slane %v116, %v123
    %v125 = vcombine.high %v124, %v124
    %v127 = vunpack.c.l.s4 1966171168
    %v128 = vunpack.c.0.s8 %v127
    %v129 = vlaneseq
    %v130 = vshrl.u32 %v129, 7
    %v131 = vsub.s32 %v128, %v130
    %v132 = vrot.slane %v124, %v131
    %v134 = vunpack.c.l.s4 1966171168
    %v135 = vunpack.c.0.s8 %v134
    %v136 = vlaneseq
    %v137 = vshrl.u32 %v136, 7
    %v138 = vsub.s32 %v135, %v137
    %v139 = vrot.slane %v125, %v138
    %v140 = vcombine.high %v132, %v132
    %v141 = vcombine.high %v139, %v139
    %v142 = vunpack.i.l.s16 %v132
    %v143 = vunpack.i.h.s16 %v132
    %v144 = vunpack.i.l.s16 %v139
    %v145 = vunpack.i.h.s16 %v139
    %v146 = vunpack.i.l.s16 %v140
    %v147 = vunpack.i.h.s16 %v140
    %v148 = vunpack.i.l.s16 %v141
    %v149 = vunpack.i.h.s16 %v141
    %v150 = vld [vmem:[#allocation2] sm:$0xff]
    %v151 = vld [vmem:[#allocation2 + $0x8] sm:$0xff]
    %v152 = vld [vmem:[#allocation2 + $0x10] sm:$0xff]
    %v153 = vld [vmem:[#allocation2 + $0x18] sm:$0xff]
    %v154 = vld [vmem:[#allocation2 + $0x20] sm:$0xff]
    %v155 = vld [vmem:[#allocation2 + $0x28] sm:$0xff]
    %v156 = vld [vmem:[#allocation2 + $0x30] sm:$0xff]
    %v157 = vld [vmem:[#allocation2 + $0x38] sm:$0xff]
    %v158 = vpack.c.bf16 %v150, %v150
    %v159 = vpack.c.bf16 %v151, %v151
    %v160 = vpack.c.bf16 %v152, %v152
    %v161 = vpack.c.bf16 %v153, %v153
    %v162 = vpack.c.bf16 %v154, %v154
    %v163 = vpack.c.bf16 %v155, %v155
    %v164 = vpack.c.bf16 %v156, %v156
    %v165 = vpack.c.bf16 %v157, %v157
    %v166 = vpack.i.b16 %v142, %v142
    %v167 = vlaneseq
    %v168 = vshrl.u32 %v167, 7
    %v169 = vsub.s32 0, %v168
    %v170 = vrot.slane %v166, %v169
    %v172 = vsel %vm112, %v170, 0
    %vm174 = vcmask 1043456
    %v176 = vsel %vm174, %v158, 0
    %178 = vmatprep.subr.bf16.mxu0 0
    %179 = vmatpush1.bf16.msra.mxu0 0
    %180 = vmatprep.subr.bf16.mxu0 0
    %181 = vmatpush1.bf16.msra.mxu0 0
    %182 = vmatprep.subr.bf16.mxu0 0
    %183 = vmatpush1.bf16.msra.mxu0 0
    %184 = vmatprep.subr.bf16.mxu0 0
    %185 = vmatpush1.bf16.msra.mxu0 0
    %186 = vmatprep.subr.bf16.mxu0 0
    %187 = vmatpush1.bf16.msra.mxu0 0
    %188 = vmatprep.subr.bf16.mxu0 0
    %189 = vmatpush1.bf16.msra.mxu0 0
    %190 = vmatprep.subr.bf16.mxu0 0
    %191 = vmatpush1.bf16.msra.mxu0 0
    %192 = vmatprep.subr.bf16.mxu0 0
    %193 = vmatpush1.bf16.msra.mxu0 %v176
    %194 = vmatprep.subr.bf16.mxu0 0
    %195 = vmatpush2.bf16.msra.mxu0 0
    %196 = vmatprep.subr.bf16.mxu0 0
    %197 = vmatpush2.bf16.msra.mxu0 0
    %198 = vmatprep.subr.bf16.mxu0 0
    %199 = vmatpush2.bf16.msra.mxu0 0
    %200 = vmatprep.subr.bf16.mxu0 0
    %201 = vmatpush2.bf16.msra.mxu0 0
    %202 = vmatprep.subr.bf16.mxu0 0
    %203 = vmatpush2.bf16.msra.mxu0 0
    %204 = vmatprep.subr.bf16.mxu0 0
    %205 = vmatpush2.bf16.msra.mxu0 0
    %206 = vmatprep.subr.bf16.mxu0 0
    %207 = vmatpush2.bf16.msra.mxu0 0
    %208 = vmatprep.subr.bf16.mxu0 0
    %209 = vmatpush2.bf16.msra.mxu0 0
    %210 = vmatprep.mubr.bf16.mxu0 0
    %211 = vmatmul.mubr.bf16.gmra.mxu0 %v172
    %v212 = vpop.f32.mrf.mxu0
    %v213 = vadd.f32 0.0, %v212
    %v214 = vpop.f32.mrf.mxu0
    %v215 = vpop.f32.mrf.mxu0
    %v216 = vpop.f32.mrf.mxu0
    %217 = vdwg.mxu0
    %v218 = vpack.i.b16 %v143, %v143
    %v219 = vlaneseq
    %v220 = vshrl.u32 %v219, 7
    %v221 = vsub.s32 0, %v220
    %v222 = vrot.slane %v218, %v221
    %v224 = vsel %vm112, %v222, 0
    %v227 = vsel %vm174, %v159, 0
    %229 = vmatprep.subr.bf16.mxu0 0
    %230 = vmatpush1.bf16.msra.mxu0 0
    %231 = vmatprep.subr.bf16.mxu0 0
    %232 = vmatpush1.bf16.msra.mxu0 0
    %233 = vmatprep.subr.bf16.mxu0 0
    %234 = vmatpush1.bf16.msra.mxu0 0
    %235 = vmatprep.subr.bf16.mxu0 0
    %236 = vmatpush1.bf16.msra.mxu0 0
    %237 = vmatprep.subr.bf16.mxu0 0
    %238 = vmatpush1.bf16.msra.mxu0 0
    %239 = vmatprep.subr.bf16.mxu0 0
    %240 = vmatpush1.bf16.msra.mxu0 0
    %241 = vmatprep.subr.bf16.mxu0 0
    %242 = vmatpush1.bf16.msra.mxu0 0
    %243 = vmatprep.subr.bf16.mxu0 0
    %244 = vmatpush1.bf16.msra.mxu0 %v227
    %245 = vmatprep.subr.bf16.mxu0 0
    %246 = vmatpush2.bf16.msra.mxu0 0
    %247 = vmatprep.subr.bf16.mxu0 0
    %248 = vmatpush2.bf16.msra.mxu0 0
    %249 = vmatprep.subr.bf16.mxu0 0
    %250 = vmatpush2.bf16.msra.mxu0 0
    %251 = vmatprep.subr.bf16.mxu0 0
    %252 = vmatpush2.bf16.msra.mxu0 0
    %253 = vmatprep.subr.bf16.mxu0 0
    %254 = vmatpush2.bf16.msra.mxu0 0
    %255 = vmatprep.subr.bf16.mxu0 0
    %256 = vmatpush2.bf16.msra.mxu0 0
    %257 = vmatprep.subr.bf16.mxu0 0
    %258 = vmatpush2.bf16.msra.mxu0 0
    %259 = vmatprep.subr.bf16.mxu0 0
    %260 = vmatpush2.bf16.msra.mxu0 0
    %261 = vmatprep.mubr.bf16.mxu0 0
    %262 = vmatmul.mubr.bf16.gmra.mxu0 %v224
    %v263 = vpop.f32.mrf.mxu0
    %v264 = vadd.f32 0.0, %v263
    %v265 = vpop.f32.mrf.mxu0
    %v266 = vpop.f32.mrf.mxu0
    %v267 = vpop.f32.mrf.mxu0
    %268 = vdwg.mxu0
    %v269 = vpack.i.b16 %v144, %v144
    %v270 = vlaneseq
    %v271 = vshrl.u32 %v270, 7
    %v272 = vsub.s32 0, %v271
    %v273 = vrot.slane %v269, %v272
    %v275 = vsel %vm112, %v273, 0
    %v278 = vsel %vm174, %v160, 0
    %280 = vmatprep.subr.bf16.mxu0 0
    %281 = vmatpush1.bf16.msra.mxu0 0
    %282 = vmatprep.subr.bf16.mxu0 0
    %283 = vmatpush1.bf16.msra.mxu0 0
    %284 = vmatprep.subr.bf16.mxu0 0
    %285 = vmatpush1.bf16.msra.mxu0 0
    %286 = vmatprep.subr.bf16.mxu0 0
    %287 = vmatpush1.bf16.msra.mxu0 0
    %288 = vmatprep.subr.bf16.mxu0 0
    %289 = vmatpush1.bf16.msra.mxu0 0
    %290 = vmatprep.subr.bf16.mxu0 0
    %291 = vmatpush1.bf16.msra.mxu0 0
    %292 = vmatprep.subr.bf16.mxu0 0
    %293 = vmatpush1.bf16.msra.mxu0 0
    %294 = vmatprep.subr.bf16.mxu0 0
    %295 = vmatpush1.bf16.msra.mxu0 %v278
    %296 = vmatprep.subr.bf16.mxu0 0
    %297 = vmatpush2.bf16.msra.mxu0 0
    %298 = vmatprep.subr.bf16.mxu0 0
    %299 = vmatpush2.bf16.msra.mxu0 0
    %300 = vmatprep.subr.bf16.mxu0 0
    %301 = vmatpush2.bf16.msra.mxu0 0
    %302 = vmatprep.subr.bf16.mxu0 0
    %303 = vmatpush2.bf16.msra.mxu0 0
    %304 = vmatprep.subr.bf16.mxu0 0
    %305 = vmatpush2.bf16.msra.mxu0 0
    %306 = vmatprep.subr.bf16.mxu0 0
    %307 = vmatpush2.bf16.msra.mxu0 0
    %308 = vmatprep.subr.bf16.mxu0 0
    %309 = vmatpush2.bf16.msra.mxu0 0
    %310 = vmatprep.subr.bf16.mxu0 0
    %311 = vmatpush2.bf16.msra.mxu0 0
    %312 = vmatprep.mubr.bf16.mxu0 0
    %313 = vmatmul.mubr.bf16.gmra.mxu0 %v275
    %v314 = vpop.f32.mrf.mxu0
    %v315 = vadd.f32 0.0, %v314
    %v316 = vpop.f32.mrf.mxu0
    %v317 = vpop.f32.mrf.mxu0
    %v318 = vpop.f32.mrf.mxu0
    %319 = vdwg.mxu0
    %v320 = vpack.i.b16 %v145, %v145
    %v321 = vlaneseq
    %v322 = vshrl.u32 %v321, 7
    %v323 = vsub.s32 0, %v322
    %v324 = vrot.slane %v320, %v323
    %v326 = vsel %vm112, %v324, 0
    %v329 = vsel %vm174, %v161, 0
    %331 = vmatprep.subr.bf16.mxu0 0
    %332 = vmatpush1.bf16.msra.mxu0 0
    %333 = vmatprep.subr.bf16.mxu0 0
    %334 = vmatpush1.bf16.msra.mxu0 0
    %335 = vmatprep.subr.bf16.mxu0 0
    %336 = vmatpush1.bf16.msra.mxu0 0
    %337 = vmatprep.subr.bf16.mxu0 0
    %338 = vmatpush1.bf16.msra.mxu0 0
    %339 = vmatprep.subr.bf16.mxu0 0
    %340 = vmatpush1.bf16.msra.mxu0 0
    %341 = vmatprep.subr.bf16.mxu0 0
    %342 = vmatpush1.bf16.msra.mxu0 0
    %343 = vmatprep.subr.bf16.mxu0 0
    %344 = vmatpush1.bf16.msra.mxu0 0
    %345 = vmatprep.subr.bf16.mxu0 0
    %346 = vmatpush1.bf16.msra.mxu0 %v329
    %347 = vmatprep.subr.bf16.mxu0 0
    %348 = vmatpush2.bf16.msra.mxu0 0
    %349 = vmatprep.subr.bf16.mxu0 0
    %350 = vmatpush2.bf16.msra.mxu0 0
    %351 = vmatprep.subr.bf16.mxu0 0
    %352 = vmatpush2.bf16.msra.mxu0 0
    %353 = vmatprep.subr.bf16.mxu0 0
    %354 = vmatpush2.bf16.msra.mxu0 0
    %355 = vmatprep.subr.bf16.mxu0 0
    %356 = vmatpush2.bf16.msra.mxu0 0
    %357 = vmatprep.subr.bf16.mxu0 0
    %358 = vmatpush2.bf16.msra.mxu0 0
    %359 = vmatprep.subr.bf16.mxu0 0
    %360 = vmatpush2.bf16.msra.mxu0 0
    %361 = vmatprep.subr.bf16.mxu0 0
    %362 = vmatpush2.bf16.msra.mxu0 0
    %363 = vmatprep.mubr.bf16.mxu0 0
    %364 = vmatmul.mubr.bf16.gmra.mxu0 %v326
    %v365 = vpop.f32.mrf.mxu0
    %v366 = vadd.f32 0.0, %v365
    %v367 = vpop.f32.mrf.mxu0
    %v368 = vpop.f32.mrf.mxu0
    %v369 = vpop.f32.mrf.mxu0
    %370 = vdwg.mxu0
    %v371 = vpack.i.b16 %v146, %v146
    %v372 = vlaneseq
    %v373 = vshrl.u32 %v372, 7
    %v374 = vsub.s32 0, %v373
    %v375 = vrot.slane %v371, %v374
    %v377 = vsel %vm112, %v375, 0
    %v380 = vsel %vm174, %v162, 0
    %382 = vmatprep.subr.bf16.mxu0 0
    %383 = vmatpush1.bf16.msra.mxu0 0
    %384 = vmatprep.subr.bf16.mxu0 0
    %385 = vmatpush1.bf16.msra.mxu0 0
    %386 = vmatprep.subr.bf16.mxu0 0
    %387 = vmatpush1.bf16.msra.mxu0 0
    %388 = vmatprep.subr.bf16.mxu0 0
    %389 = vmatpush1.bf16.msra.mxu0 0
    %390 = vmatprep.subr.bf16.mxu0 0
    %391 = vmatpush1.bf16.msra.mxu0 0
    %392 = vmatprep.subr.bf16.mxu0 0
    %393 = vmatpush1.bf16.msra.mxu0 0
    %394 = vmatprep.subr.bf16.mxu0 0
    %395 = vmatpush1.bf16.msra.mxu0 0
    %396 = vmatprep.subr.bf16.mxu0 0
    %397 = vmatpush1.bf16.msra.mxu0 %v380
    %398 = vmatprep.subr.bf16.mxu0 0
    %399 = vmatpush2.bf16.msra.mxu0 0
    %400 = vmatprep.subr.bf16.mxu0 0
    %401 = vmatpush2.bf16.msra.mxu0 0
    %402 = vmatprep.subr.bf16.mxu0 0
    %403 = vmatpush2.bf16.msra.mxu0 0
    %404 = vmatprep.subr.bf16.mxu0 0
    %405 = vmatpush2.bf16.msra.mxu0 0
    %406 = vmatprep.subr.bf16.mxu0 0
    %407 = vmatpush2.bf16.msra.mxu0 0
    %408 = vmatprep.subr.bf16.mxu0 0
    %409 = vmatpush2.bf16.msra.mxu0 0
    %410 = vmatprep.subr.bf16.mxu0 0
    %411 = vmatpush2.bf16.msra.mxu0 0
    %412 = vmatprep.subr.bf16.mxu0 0
    %413 = vmatpush2.bf16.msra.mxu0 0
    %414 = vmatprep.mubr.bf16.mxu0 0
    %415 = vmatmul.mubr.bf16.gmra.mxu0 %v377
    %v416 = vpop.f32.mrf.mxu0
    %v417 = vadd.f32 0.0, %v416
    %v418 = vpop.f32.mrf.mxu0
    %v419 = vpop.f32.mrf.mxu0
    %v420 = vpop.f32.mrf.mxu0
    %421 = vdwg.mxu0
    %v422 = vpack.i.b16 %v147, %v147
    %v423 = vlaneseq
    %v424 = vshrl.u32 %v423, 7
    %v425 = vsub.s32 0, %v424
    %v426 = vrot.slane %v422, %v425
    %v428 = vsel %vm112, %v426, 0
    %v431 = vsel %vm174, %v163, 0
    %433 = vmatprep.subr.bf16.mxu0 0
    %434 = vmatpush1.bf16.msra.mxu0 0
    %435 = vmatprep.subr.bf16.mxu0 0
    %436 = vmatpush1.bf16.msra.mxu0 0
    %437 = vmatprep.subr.bf16.mxu0 0
    %438 = vmatpush1.bf16.msra.mxu0 0
    %439 = vmatprep.subr.bf16.mxu0 0
    %440 = vmatpush1.bf16.msra.mxu0 0
    %441 = vmatprep.subr.bf16.mxu0 0
    %442 = vmatpush1.bf16.msra.mxu0 0
    %443 = vmatprep.subr.bf16.mxu0 0
    %444 = vmatpush1.bf16.msra.mxu0 0
    %445 = vmatprep.subr.bf16.mxu0 0
    %446 = vmatpush1.bf16.msra.mxu0 0
    %447 = vmatprep.subr.bf16.mxu0 0
    %448 = vmatpush1.bf16.msra.mxu0 %v431
    %449 = vmatprep.subr.bf16.mxu0 0
    %450 = vmatpush2.bf16.msra.mxu0 0
    %451 = vmatprep.subr.bf16.mxu0 0
    %452 = vmatpush2.bf16.msra.mxu0 0
    %453 = vmatprep.subr.bf16.mxu0 0
    %454 = vmatpush2.bf16.msra.mxu0 0
    %455 = vmatprep.subr.bf16.mxu0 0
    %456 = vmatpush2.bf16.msra.mxu0 0
    %457 = vmatprep.subr.bf16.mxu0 0
    %458 = vmatpush2.bf16.msra.mxu0 0
    %459 = vmatprep.subr.bf16.mxu0 0
    %460 = vmatpush2.bf16.msra.mxu0 0
    %461 = vmatprep.subr.bf16.mxu0 0
    %462 = vmatpush2.bf16.msra.mxu0 0
    %463 = vmatprep.subr.bf16.mxu0 0
    %464 = vmatpush2.bf16.msra.mxu0 0
    %465 = vmatprep.mubr.bf16.mxu0 0
    %466 = vmatmul.mubr.bf16.gmra.mxu0 %v428
    %v467 = vpop.f32.mrf.mxu0
    %v468 = vadd.f32 0.0, %v467
    %v469 = vpop.f32.mrf.mxu0
    %v470 = vpop.f32.mrf.mxu0
    %v471 = vpop.f32.mrf.mxu0
    %472 = vdwg.mxu0
    %v473 = vpack.i.b16 %v148, %v148
    %v474 = vlaneseq
    %v475 = vshrl.u32 %v474, 7
    %v476 = vsub.s32 0, %v475
    %v477 = vrot.slane %v473, %v476
    %v479 = vsel %vm112, %v477, 0
    %v482 = vsel %vm174, %v164, 0
    %484 = vmatprep.subr.bf16.mxu0 0
    %485 = vmatpush1.bf16.msra.mxu0 0
    %486 = vmatprep.subr.bf16.mxu0 0
    %487 = vmatpush1.bf16.msra.mxu0 0
    %488 = vmatprep.subr.bf16.mxu0 0
    %489 = vmatpush1.bf16.msra.mxu0 0
    %490 = vmatprep.subr.bf16.mxu0 0
    %491 = vmatpush1.bf16.msra.mxu0 0
    %492 = vmatprep.subr.bf16.mxu0 0
    %493 = vmatpush1.bf16.msra.mxu0 0
    %494 = vmatprep.subr.bf16.mxu0 0
    %495 = vmatpush1.bf16.msra.mxu0 0
    %496 = vmatprep.subr.bf16.mxu0 0
    %497 = vmatpush1.bf16.msra.mxu0 0
    %498 = vmatprep.subr.bf16.mxu0 0
    %499 = vmatpush1.bf16.msra.mxu0 %v482
    %500 = vmatprep.subr.bf16.mxu0 0
    %501 = vmatpush2.bf16.msra.mxu0 0
    %502 = vmatprep.subr.bf16.mxu0 0
    %503 = vmatpush2.bf16.msra.mxu0 0
    %504 = vmatprep.subr.bf16.mxu0 0
    %505 = vmatpush2.bf16.msra.mxu0 0
    %506 = vmatprep.subr.bf16.mxu0 0
    %507 = vmatpush2.bf16.msra.mxu0 0
    %508 = vmatprep.subr.bf16.mxu0 0
    %509 = vmatpush2.bf16.msra.mxu0 0
    %510 = vmatprep.subr.bf16.mxu0 0
    %511 = vmatpush2.bf16.msra.mxu0 0
    %512 = vmatprep.subr.bf16.mxu0 0
    %513 = vmatpush2.bf16.msra.mxu0 0
    %514 = vmatprep.subr.bf16.mxu0 0
    %515 = vmatpush2.bf16.msra.mxu0 0
    %516 = vmatprep.mubr.bf16.mxu0 0
    %517 = vmatmul.mubr.bf16.gmra.mxu0 %v479
    %v518 = vpop.f32.mrf.mxu0
    %v519 = vadd.f32 0.0, %v518
    %v520 = vpop.f32.mrf.mxu0
    %v521 = vpop.f32.mrf.mxu0
    %v522 = vpop.f32.mrf.mxu0
    %523 = vdwg.mxu0
    %v524 = vpack.i.b16 %v149, %v149
    %v525 = vlaneseq
    %v526 = vshrl.u32 %v525, 7
    %v527 = vsub.s32 0, %v526
    %v528 = vrot.slane %v524, %v527
    %v530 = vsel %vm112, %v528, 0
    %v533 = vsel %vm174, %v165, 0
    %535 = vmatprep.subr.bf16.mxu0 0
    %536 = vmatpush1.bf16.msra.mxu0 0
    %537 = vmatprep.subr.bf16.mxu0 0
    %538 = vmatpush1.bf16.msra.mxu0 0
    %539 = vmatprep.subr.bf16.mxu0 0
    %540 = vmatpush1.bf16.msra.mxu0 0
    %541 = vmatprep.subr.bf16.mxu0 0
    %542 = vmatpush1.bf16.msra.mxu0 0
    %543 = vmatprep.subr.bf16.mxu0 0
    %544 = vmatpush1.bf16.msra.mxu0 0
    %545 = vmatprep.subr.bf16.mxu0 0
    %546 = vmatpush1.bf16.msra.mxu0 0
    %547 = vmatprep.subr.bf16.mxu0 0
    %548 = vmatpush1.bf16.msra.mxu0 0
    %549 = vmatprep.subr.bf16.mxu0 0
    %550 = vmatpush1.bf16.msra.mxu0 %v533
    %551 = vmatprep.subr.bf16.mxu0 0
    %552 = vmatpush2.bf16.msra.mxu0 0
    %553 = vmatprep.subr.bf16.mxu0 0
    %554 = vmatpush2.bf16.msra.mxu0 0
    %555 = vmatprep.subr.bf16.mxu0 0
    %556 = vmatpush2.bf16.msra.mxu0 0
    %557 = vmatprep.subr.bf16.mxu0 0
    %558 = vmatpush2.bf16.msra.mxu0 0
    %559 = vmatprep.subr.bf16.mxu0 0
    %560 = vmatpush2.bf16.msra.mxu0 0
    %561 = vmatprep.subr.bf16.mxu0 0
    %562 = vmatpush2.bf16.msra.mxu0 0
    %563 = vmatprep.subr.bf16.mxu0 0
    %564 = vmatpush2.bf16.msra.mxu0 0
    %565 = vmatprep.subr.bf16.mxu0 0
    %566 = vmatpush2.bf16.msra.mxu0 0
    %567 = vmatprep.mubr.bf16.mxu0 0
    %568 = vmatmul.mubr.bf16.gmra.mxu0 %v530
    %v569 = vpop.f32.mrf.mxu0
    %v570 = vadd.f32 0.0, %v569
    %v571 = vpop.f32.mrf.mxu0
    %v572 = vpop.f32.mrf.mxu0
    %v573 = vpop.f32.mrf.mxu0
    %574 = vdwg.mxu0
    %v575 = vmax.f32 %v115, 1.0
    %v576 = vrcp.pop %v575
    %v578 = vrot.slane %v576, 1
    %v579 = vrot.slane %v576, 2
    %v580 = vrot.slane %v576, 3
    %v581 = vrot.slane %v576, 4
    %v582 = vrot.slane %v576, 5
    %v583 = vrot.slane %v576, 6
    %v584 = vrot.slane %v576, 7
    %v593 = vmul.f32 %v213, %v576
    %v594 = vmul.f32 %v264, %v578
    %v595 = vmul.f32 %v315, %v579
    %v596 = vmul.f32 %v366, %v580
    %v597 = vmul.f32 %v417, %v581
    %v598 = vmul.f32 %v468, %v582
    %v599 = vmul.f32 %v519, %v583
    %v600 = vmul.f32 %v570, %v584
    %v601 = vpack.c.bf16 %v593, %v593
    %v602 = vpack.c.bf16 %v594, %v594
    %v603 = vpack.c.bf16 %v595, %v595
    %v604 = vpack.c.bf16 %v596, %v596
    %v605 = vpack.c.bf16 %v597, %v597
    %v606 = vpack.c.bf16 %v598, %v598
    %v607 = vpack.c.bf16 %v599, %v599
    %v608 = vpack.c.bf16 %v600, %v600
    %v609 = vld [vmem:[#allocation8] sm:$0xf]
    %v610 = vld [vmem:[#allocation8 + $0x4] sm:$0xf]
    %v611 = vld [vmem:[#allocation8 + $0x8] sm:$0xf]
    %v612 = vld [vmem:[#allocation8 + $0xc] sm:$0xf]
    %v613 = vld [vmem:[%s7] sm:$0x1]
    %v614 = vlaneseq
    %v615 = vshrl.u32 %v614, 7
    %v616 = vsub.s32 0, %v615
    %v617 = vrot.slane %v613, %v616
    %v626 = vunpack.c.l.b16 %v601
    %v627 = vunpack.c.l.b16 %v602
    %v628 = vunpack.c.l.b16 %v603
    %v629 = vunpack.c.l.b16 %v604
    %v630 = vunpack.c.l.b16 %v605
    %v631 = vunpack.c.l.b16 %v606
    %v632 = vunpack.c.l.b16 %v607
    %v633 = vunpack.c.l.b16 %v608
    %v634 = vrot.slane %v627, 7
    %vm635 = vcmask 1041409
    %v636 = vsel %vm635, %v634, %v626
    %v637 = vrot.slane %v628, 6
    %vm638 = vcmask 1042434
    %v639 = vsel %vm638, %v637, %v636
    %v640 = vrot.slane %v629, 5
    %vm641 = vcmask 1043459
    %v642 = vsel %vm641, %v640, %v639
    %v643 = vrot.slane %v630, 4
    %vm644 = vcmask 1044484
    %v645 = vsel %vm644, %v643, %v642
    %v646 = vrot.slane %v631, 3
    %vm647 = vcmask 1045509
    %v648 = vsel %vm647, %v646, %v645
    %v649 = vrot.slane %v632, 2
    %vm650 = vcmask 1046534
    %v651 = vsel %vm650, %v649, %v648
    %v652 = vrot.slane %v633, 1
    %vm653 = vcmask 1047559
    %v654 = vsel %vm653, %v652, %v651
    %v655 = vpack.c.b16 %v654, %v654
    %v660 = vunpack.c.l.b16 %v609
    %v661 = vunpack.c.l.b16 %v610
    %v662 = vunpack.c.l.b16 %v611
    %v663 = vunpack.c.l.b16 %v612
    %v664 = vpack.c.b16 %v661, %v660
    %v665 = vpack.c.b16 %v663, %v662
    %vm668 = vcmask 261120
    %v670 = vsel %vm668, %v655, 0
    %672 = vmatprep.subr.bf16.mxu0 0
    %673 = vmatpush1.bf16.msra.mxu0 0
    %674 = vmatprep.subr.bf16.mxu0 0
    %675 = vmatpush1.bf16.msra.mxu0 0
    %676 = vmatprep.subr.bf16.mxu0 0
    %677 = vmatpush1.bf16.msra.mxu0 0
    %678 = vmatprep.subr.bf16.mxu0 0
    %679 = vmatpush1.bf16.msra.mxu0 0
    %680 = vmatprep.subr.bf16.mxu0 0
    %681 = vmatpush1.bf16.msra.mxu0 0
    %682 = vmatprep.subr.bf16.mxu0 0
    %683 = vmatpush1.bf16.msra.mxu0 0
    %684 = vmatprep.subr.bf16.mxu0 0
    %685 = vmatpush1.bf16.msra.mxu0 %v665
    %686 = vmatprep.subr.bf16.mxu0 0
    %687 = vmatpush1.bf16.msra.mxu0 %v664
    %688 = vmatprep.subr.bf16.mxu0 0
    %689 = vmatpush2.bf16.msra.mxu0 0
    %690 = vmatprep.subr.bf16.mxu0 0
    %691 = vmatpush2.bf16.msra.mxu0 0
    %692 = vmatprep.subr.bf16.mxu0 0
    %693 = vmatpush2.bf16.msra.mxu0 0
    %694 = vmatprep.subr.bf16.mxu0 0
    %695 = vmatpush2.bf16.msra.mxu0 0
    %696 = vmatprep.subr.bf16.mxu0 0
    %697 = vmatpush2.bf16.msra.mxu0 0
    %698 = vmatprep.subr.bf16.mxu0 0
    %699 = vmatpush2.bf16.msra.mxu0 0
    %700 = vmatprep.subr.bf16.mxu0 0
    %701 = vmatpush2.bf16.msra.mxu0 0
    %702 = vmatprep.subr.bf16.mxu0 0
    %703 = vmatpush2.bf16.msra.mxu0 0
    %704 = vmatprep.mubr.bf16.mxu0 0
    %705 = vmatmul.mubr.bf16.gmra.mxu0 %v670
    %v706 = vpop.f32.mrf.mxu0
    %v707 = vadd.f32 %v617, %v706
    %v708 = vpop.f32.mrf.mxu0
    %v709 = vpop.f32.mrf.mxu0
    %v710 = vpop.f32.mrf.mxu0
    %711 = vdwg.mxu0
    %v712 = vtanh.pop %v707
    %v713 = vld [vmem:[#allocation7] sm:$0xff]
    %v714 = vld [vmem:[#allocation7 + $0x8] sm:$0xff]
    %v715 = vld [vmem:[#allocation7 + $0x10] sm:$0xff]
    %v716 = vld [vmem:[#allocation7 + $0x18] sm:$0xff]
    %v717 = vld [vmem:[#allocation7 + $0x20] sm:$0xff]
    %v718 = vld [vmem:[#allocation7 + $0x28] sm:$0xff]
    %v719 = vld [vmem:[#allocation7 + $0x30] sm:$0xff]
    %v720 = vld [vmem:[#allocation7 + $0x38] sm:$0xff]
    %v729 = vcombine.high %v713, %v713
    %v730 = vcombine.high %v714, %v714
    %v731 = vcombine.high %v715, %v715
    %v732 = vcombine.high %v716, %v716
    %v733 = vcombine.high %v717, %v717
    %v734 = vcombine.high %v718, %v718
    %v735 = vcombine.high %v719, %v719
    %v736 = vcombine.high %v720, %v720
    %v745 = vsel %vm174, %v713, 0.0
    %v746 = vsel %vm174, %v729, 0.0
    %v747 = vadd.f32 %v745, %v746
    %748 = vadd.xlane.f32.xlu0 %v747
    %v749 = vpop.xlane.xlu0 %748
    %v750 = vsel %vm174, %v714, 0.0
    %v751 = vsel %vm174, %v730, 0.0
    %v752 = vadd.f32 %v750, %v751
    %753 = vadd.xlane.f32.xlu0 %v752
    %v754 = vpop.xlane.xlu0 %753
    %v755 = vsel %vm174, %v715, 0.0
    %v756 = vsel %vm174, %v731, 0.0
    %v757 = vadd.f32 %v755, %v756
    %758 = vadd.xlane.f32.xlu0 %v757
    %v759 = vpop.xlane.xlu0 %758
    %v760 = vsel %vm174, %v716, 0.0
    %v761 = vsel %vm174, %v732, 0.0
    %v762 = vadd.f32 %v760, %v761
    %763 = vadd.xlane.f32.xlu0 %v762
    %v764 = vpop.xlane.xlu0 %763
    %v765 = vsel %vm174, %v717, 0.0
    %v766 = vsel %vm174, %v733, 0.0
    %v767 = vadd.f32 %v765, %v766
    %768 = vadd.xlane.f32.xlu0 %v767
    %v769 = vpop.xlane.xlu0 %768
    %v770 = vsel %vm174, %v718, 0.0
    %v771 = vsel %vm174, %v734, 0.0
    %v772 = vadd.f32 %v770, %v771
    %773 = vadd.xlane.f32.xlu0 %v772
    %v774 = vpop.xlane.xlu0 %773
    %v775 = vsel %vm174, %v719, 0.0
    %v776 = vsel %vm174, %v735, 0.0
    %v777 = vadd.f32 %v775, %v776
    %778 = vadd.xlane.f32.xlu0 %v777
    %v779 = vpop.xlane.xlu0 %778
    %v780 = vsel %vm174, %v720, 0.0
    %v781 = vsel %vm174, %v736, 0.0
    %v782 = vadd.f32 %v780, %v781
    %783 = vadd.xlane.f32.xlu0 %v782
    %v784 = vpop.xlane.xlu0 %783
    %v785 = vrcp.pop 256.0
    %v786 = vmul.f32 %v749, %v785
    %v787 = vmul.f32 %v754, %v785
    %v788 = vmul.f32 %v759, %v785
    %v789 = vmul.f32 %v764, %v785
    %v790 = vmul.f32 %v769, %v785
    %v791 = vmul.f32 %v774, %v785
    %v792 = vmul.f32 %v779, %v785
    %v793 = vmul.f32 %v784, %v785
    %v794 = vpack.c.bf16 %v786, %v786
    %v795 = vpack.c.bf16 %v787, %v787
    %v796 = vpack.c.bf16 %v788, %v788
    %v797 = vpack.c.bf16 %v789, %v789
    %v798 = vpack.c.bf16 %v790, %v790
    %v799 = vpack.c.bf16 %v791, %v791
    %v800 = vpack.c.bf16 %v792, %v792
    %v801 = vpack.c.bf16 %v793, %v793
    %v802 = vld [vmem:[%s4] sm:$0x3]
    %v803 = vld [vmem:[%s7 + $0x1] sm:$0x1]
    %v804 = vlaneseq
    %v805 = vshrl.u32 %v804, 7
    %v806 = vsub.s32 0, %v805
    %v807 = vrot.slane %v803, %v806
    %v816 = vunpack.c.l.b16 %v794
    %v817 = vunpack.c.l.b16 %v795
    %v818 = vunpack.c.l.b16 %v796
    %v819 = vunpack.c.l.b16 %v797
    %v820 = vunpack.c.l.b16 %v798
    %v821 = vunpack.c.l.b16 %v799
    %v822 = vunpack.c.l.b16 %v800
    %v823 = vunpack.c.l.b16 %v801
    %v824 = vlaneseq
    %v825 = vand.u32 %v824, 127
    %v826 = vlaneseq
    %v827 = vshrl.u32 %v826, 7
    %v828 = vsub.s32 %v825, %v827
    %v829 = vrot.slane %v816, %v828
    %v830 = vlaneseq
    %v831 = vshrl.u32 %v830, 7
    %v832 = vsub.s32 %v825, %v831
    %v833 = vrot.slane %v817, %v832
    %v834 = vlaneseq
    %v835 = vshrl.u32 %v834, 7
    %v836 = vsub.s32 %v825, %v835
    %v837 = vrot.slane %v818, %v836
    %v838 = vlaneseq
    %v839 = vshrl.u32 %v838, 7
    %v840 = vsub.s32 %v825, %v839
    %v841 = vrot.slane %v819, %v840
    %v842 = vlaneseq
    %v843 = vshrl.u32 %v842, 7
    %v844 = vsub.s32 %v825, %v843
    %v845 = vrot.slane %v820, %v844
    %v846 = vlaneseq
    %v847 = vshrl.u32 %v846, 7
    %v848 = vsub.s32 %v825, %v847
    %v849 = vrot.slane %v821, %v848
    %v850 = vlaneseq
    %v851 = vshrl.u32 %v850, 7
    %v852 = vsub.s32 %v825, %v851
    %v853 = vrot.slane %v822, %v852
    %v854 = vlaneseq
    %v855 = vshrl.u32 %v854, 7
    %v856 = vsub.s32 %v825, %v855
    %v857 = vrot.slane %v823, %v856
    %v858 = vsel %vm635, %v833, %v829
    %v859 = vsel %vm638, %v837, %v858
    %v860 = vsel %vm641, %v841, %v859
    %v861 = vsel %vm644, %v845, %v860
    %v862 = vsel %vm647, %v849, %v861
    %v863 = vsel %vm650, %v853, %v862
    %v864 = vsel %vm653, %v857, %v863
    %v865 = vpack.c.b16 %v864, %v864
    %vm866 = vcmask 31744
    %v868 = vsel %vm866, %v865, 0
    %vm870 = vcmask 1041408
    %v872 = vsel %vm870, %v802, 0
    %874 = vmatprep.subr.bf16.mxu0 0
    %875 = vmatpush1.bf16.msra.mxu0 0
    %876 = vmatprep.subr.bf16.mxu0 0
    %877 = vmatpush1.bf16.msra.mxu0 0
    %878 = vmatprep.subr.bf16.mxu0 0
    %879 = vmatpush1.bf16.msra.mxu0 0
    %880 = vmatprep.subr.bf16.mxu0 0
    %881 = vmatpush1.bf16.msra.mxu0 0
    %882 = vmatprep.subr.bf16.mxu0 0
    %883 = vmatpush1.bf16.msra.mxu0 0
    %884 = vmatprep.subr.bf16.mxu0 0
    %885 = vmatpush1.bf16.msra.mxu0 0
    %886 = vmatprep.subr.bf16.mxu0 0
    %887 = vmatpush1.bf16.msra.mxu0 0
    %888 = vmatprep.subr.bf16.mxu0 0
    %889 = vmatpush1.bf16.msra.mxu0 %v872
    %890 = vmatprep.subr.bf16.mxu0 0
    %891 = vmatpush2.bf16.msra.mxu0 0
    %892 = vmatprep.subr.bf16.mxu0 0
    %893 = vmatpush2.bf16.msra.mxu0 0
    %894 = vmatprep.subr.bf16.mxu0 0
    %895 = vmatpush2.bf16.msra.mxu0 0
    %896 = vmatprep.subr.bf16.mxu0 0
    %897 = vmatpush2.bf16.msra.mxu0 0
    %898 = vmatprep.subr.bf16.mxu0 0
    %899 = vmatpush2.bf16.msra.mxu0 0
    %900 = vmatprep.subr.bf16.mxu0 0
    %901 = vmatpush2.bf16.msra.mxu0 0
    %902 = vmatprep.subr.bf16.mxu0 0
    %903 = vmatpush2.bf16.msra.mxu0 0
    %904 = vmatprep.subr.bf16.mxu0 0
    %905 = vmatpush2.bf16.msra.mxu0 0
    %906 = vmatprep.mubr.bf16.mxu0 0
    %907 = vmatmul.mubr.bf16.gmra.mxu0 %v868
    %v908 = vpop.f32.mrf.mxu0
    %v909 = vadd.f32 %v807, %v908
    %v910 = vpop.f32.mrf.mxu0
    %v911 = vpop.f32.mrf.mxu0
    %v912 = vpop.f32.mrf.mxu0
    %913 = vdwg.mxu0
    %v914 = vmul.f32 %v909, %v712
    %v915 = vpack.c.bf16 %v914, %v914
    %v916 = vld [vmem:[#allocation10] sm:$0xf]
    %v917 = vld [vmem:[#allocation10 + $0x4] sm:$0xf]
    %v918 = vld [vmem:[#allocation10 + $0x8] sm:$0xf]
    %v919 = vld [vmem:[#allocation10 + $0xc] sm:$0xf]
    %v920 = vld [vmem:[%s7 + $0x2] sm:$0x1]
    %v921 = vlaneseq
    %v922 = vshrl.u32 %v921, 7
    %v923 = vsub.s32 0, %v922
    %v924 = vrot.slane %v920, %v923
    %v929 = vunpack.c.l.b16 %v916
    %v930 = vunpack.c.l.b16 %v917
    %v931 = vunpack.c.l.b16 %v918
    %v932 = vunpack.c.l.b16 %v919
    %v933 = vpack.c.b16 %v930, %v929
    %v934 = vpack.c.b16 %v932, %v931
    %v938 = vsel %vm668, %v915, 0
    %940 = vmatprep.subr.bf16.mxu0 0
    %941 = vmatpush1.bf16.msra.mxu0 0
    %942 = vmatprep.subr.bf16.mxu0 0
    %943 = vmatpush1.bf16.msra.mxu0 0
    %944 = vmatprep.subr.bf16.mxu0 0
    %945 = vmatpush1.bf16.msra.mxu0 0
    %946 = vmatprep.subr.bf16.mxu0 0
    %947 = vmatpush1.bf16.msra.mxu0 0
    %948 = vmatprep.subr.bf16.mxu0 0
    %949 = vmatpush1.bf16.msra.mxu0 0
    %950 = vmatprep.subr.bf16.mxu0 0
    %951 = vmatpush1.bf16.msra.mxu0 0
    %952 = vmatprep.subr.bf16.mxu0 0
    %953 = vmatpush1.bf16.msra.mxu0 %v934
    %954 = vmatprep.subr.bf16.mxu0 0
    %955 = vmatpush1.bf16.msra.mxu0 %v933
    %956 = vmatprep.subr.bf16.mxu0 0
    %957 = vmatpush2.bf16.msra.mxu0 0
    %958 = vmatprep.subr.bf16.mxu0 0
    %959 = vmatpush2.bf16.msra.mxu0 0
    %960 = vmatprep.subr.bf16.mxu0 0
    %961 = vmatpush2.bf16.msra.mxu0 0
    %962 = vmatprep.subr.bf16.mxu0 0
    %963 = vmatpush2.bf16.msra.mxu0 0
    %964 = vmatprep.subr.bf16.mxu0 0
    %965 = vmatpush2.bf16.msra.mxu0 0
    %966 = vmatprep.subr.bf16.mxu0 0
    %967 = vmatpush2.bf16.msra.mxu0 0
    %968 = vmatprep.subr.bf16.mxu0 0
    %969 = vmatpush2.bf16.msra.mxu0 0
    %970 = vmatprep.subr.bf16.mxu0 0
    %971 = vmatpush2.bf16.msra.mxu0 0
    %972 = vmatprep.mubr.bf16.mxu0 0
    %973 = vmatmul.mubr.bf16.gmra.mxu0 %v938
    %v974 = vpop.f32.mrf.mxu0
    %v975 = vadd.f32 %v924, %v974
    %v976 = vpop.f32.mrf.mxu0
    %v977 = vpop.f32.mrf.mxu0
    %v978 = vpop.f32.mrf.mxu0
    %979 = vdwg.mxu0
    %v980 = vmax.f32 %v975, 0.0
    %v981 = vpack.c.bf16 %v980, %v980
    %v982 = vld [vmem:[#allocation11] sm:$0xf]
    %v983 = vld [vmem:[#allocation11 + $0x4] sm:$0xf]
    %v984 = vld [vmem:[#allocation11 + $0x8] sm:$0xf]
    %v985 = vld [vmem:[#allocation11 + $0xc] sm:$0xf]
    %v986 = vld [vmem:[#allocation11 + $0x10] sm:$0xf]
    %v987 = vld [vmem:[#allocation11 + $0x14] sm:$0xf]
    %v988 = vld [vmem:[#allocation11 + $0x18] sm:$0xf]
    %v989 = vld [vmem:[#allocation11 + $0x1c] sm:$0xf]
    %v990 = vld [vmem:[%s7 + $0x3] sm:$0x1]
    %v991 = vlaneseq
    %v992 = vshrl.u32 %v991, 7
    %v993 = vsub.s32 0, %v992
    %v994 = vrot.slane %v990, %v993
    %v1003 = vunpack.c.l.b16 %v982
    %v1004 = vunpack.c.l.b16 %v983
    %v1005 = vunpack.c.l.b16 %v984
    %v1006 = vunpack.c.l.b16 %v985
    %v1007 = vunpack.c.l.b16 %v986
    %v1008 = vunpack.c.l.b16 %v987
    %v1009 = vunpack.c.l.b16 %v988
    %v1010 = vunpack.c.l.b16 %v989
    %v1011 = vpack.c.b16 %v1004, %v1003
    %v1012 = vpack.c.b16 %v1006, %v1005
    %v1013 = vpack.c.b16 %v1008, %v1007
    %v1014 = vpack.c.b16 %v1010, %v1009
    %vm1019 = vcmask 523264
    %v1021 = vsel %vm1019, %v981, 0
    %1023 = vmatprep.subr.bf16.mxu0 0
    %1024 = vmatpush1.bf16.msra.mxu0 0
    %1025 = vmatprep.subr.bf16.mxu0 0
    %1026 = vmatpush1.bf16.msra.mxu0 0
    %1027 = vmatprep.subr.bf16.mxu0 0
    %1028 = vmatpush1.bf16.msra.mxu0 0
    %1029 = vmatprep.subr.bf16.mxu0 0
    %1030 = vmatpush1.bf16.msra.mxu0 0
    %1031 = vmatprep.subr.bf16.mxu0 0
    %1032 = vmatpush1.bf16.msra.mxu0 %v1014
    %1033 = vmatprep.subr.bf16.mxu0 0
    %1034 = vmatpush1.bf16.msra.mxu0 %v1013
    %1035 = vmatprep.subr.bf16.mxu0 0
    %1036 = vmatpush1.bf16.msra.mxu0 %v1012
    %1037 = vmatprep.subr.bf16.mxu0 0
    %1038 = vmatpush1.bf16.msra.mxu0 %v1011
    %1039 = vmatprep.subr.bf16.mxu0 0
    %1040 = vmatpush2.bf16.msra.mxu0 0
    %1041 = vmatprep.subr.bf16.mxu0 0
    %1042 = vmatpush2.bf16.msra.mxu0 0
    %1043 = vmatprep.subr.bf16.mxu0 0
    %1044 = vmatpush2.bf16.msra.mxu0 0
    %1045 = vmatprep.subr.bf16.mxu0 0
    %1046 = vmatpush2.bf16.msra.mxu0 0
    %1047 = vmatprep.subr.bf16.mxu0 0
    %1048 = vmatpush2.bf16.msra.mxu0 0
    %1049 = vmatprep.subr.bf16.mxu0 0
    %1050 = vmatpush2.bf16.msra.mxu0 0
    %1051 = vmatprep.subr.bf16.mxu0 0
    %1052 = vmatpush2.bf16.msra.mxu0 0
    %1053 = vmatprep.subr.bf16.mxu0 0
    %1054 = vmatpush2.bf16.msra.mxu0 0
    %1055 = vmatprep.mubr.bf16.mxu0 0
    %1056 = vmatmul.mubr.bf16.gmra.mxu0 %v1021
    %v1057 = vpop.f32.mrf.mxu0
    %v1058 = vadd.f32 %v994, %v1057
    %v1059 = vpop.f32.mrf.mxu0
    %v1060 = vpop.f32.mrf.mxu0
    %v1061 = vpop.f32.mrf.mxu0
    %1062 = vdwg.mxu0
    %1063 = vst [vmem:[#allocation13] sm:$0xff] %v1058
    // Predicated region
    $region58: #{tpu_custom_call.1} parent=1 // pred_check
      _
    $region59: #{tpu_custom_call.1} parent=1 // pred_check_branch
      %1065 = sbr.rel (0) target = $region61
    $region60: #{tpu_custom_call.1} parent=1 // pred_region
      %s1067 = ssub.s32 128, 128
      %1068 = vsyncadd [#allocation4], %s1067
      %s1070 = sshll.u32 [#allocation13], 4
      %s1071 = int_to_ptr.vmem [resolvable:$true] %s1070
      %1073 = dma.vmem_to_hbm [thread:$0]  %s1071, 128, %s8, [#allocation4]
    $region61: #{tpu_custom_call.1} parent=1 // pred_fallthru
      _
    // Predicated region
    $region62: #{tpu_custom_call.1} parent=1 // pred_check
      _
    $region63: #{tpu_custom_call.1} parent=1 // pred_check_branch
      %1075 = sbr.rel (0) target = $region65
    $region64: #{tpu_custom_call.1} parent=1 // pred_region
      %1076 = dma.done [#allocation4], 128
    $region65: #{tpu_custom_call.1} parent=1 // pred_fallthru
      _
    %1077 = vsyncpa [#allocation3], 1
    %1078 = vsyncpa [#allocation6], 1
    %1079 = vsyncpa [#allocation9], 1
    %1080 = vsyncpa [#allocation12], 1
    %1081 = vsyncpa [#allocation4], 1

</llo_original>
